<compile_context>
chip_gen: v6e
topology: v6e:2x2x1
jax: 0.10.0
libtpu: 0.0.40
codegen_flags: <defaults>
</compile_context>

<pallas_src>
import functools

import numpy as np
import jax
import jax.numpy as jnp
from jax.experimental import pallas as pl
from jax.experimental.pallas import tpu as pltpu

_HEAD_WIDE = 128      # lane-dense head when the output slab is small
_HEAD_NARROW = 8      # writeback-minimizing head for large B*N
_HEAD_GATE = 1024     # use the 128-wide head only while B*N <= this
_FLAT_AGG_MAX = 512   # use the block-diagonal consolidated aggregation while bb*N <= this


def _normalize(v):
    # TODO(synk): original `normalize` helper not in the provided source; identity assumed,
    # so threshold = ||thresh_vec|| = sqrt(2) for the default thresh_vec = [1, 1].
    return v


def _vmem_budget_bytes():
    """Per-chip VMEM budget used for batch-block sizing and vmem_limit_bytes."""
    try:
        cap = int(pltpu.get_tpu_info().vmem_capacity_bytes)
    except Exception:
        cap = 64 * 2**20          # conservative fallback (v7x per-core physical VMEM)
    return int(min(cap * 0.7, 100 * 2**20))


# ---------------------------------------------------------------------------
# Fused Pallas kernel (adjacency + graph layers + heads)
# ---------------------------------------------------------------------------
def _make_kernel(n_layers, thresh_sq, head_out, use_flat, mxu_dtype):
    cast = lambda a: a.astype(mxu_dtype)

    def kernel(locs_ref, states_ref, *refs):
        # refs = [Ws_0, Wa_0, Wdb_0, ..., Ws_{L-1}, Wa_{L-1}, Wdb_{L-1}, Wh, bh, out_ref]
        out_ref = refs[-1]
        wrefs = refs[:-1]

        locs = locs_ref[...]                            # (bb, N, 2)  f32
        s = states_ref[...]                             # (bb, N, F)  f32
        bb, N, F = s.shape
        M = bb * N

        # --- adjacency: lane-dense dx/dy slabs (no (bb,N,N,2) tensor) -----------------
        x = locs[..., 0]                                # (bb, N)
        y = locs[..., 1]
        dx = x[:, :, None] - x[:, None, :]              # (bb, N, N) lane-dense
        dy = y[:, :, None] - y[:, None, :]
        nsq = dx * dx + dy * dy
        A = (nsq < thresh_sq).astype(jnp.float32)       # diag always 1 (thresh_sq > 0)
        deg = jnp.sum(A, axis=-1)                       # (bb, N), >= 1 (self-loop)
        dinv = jax.lax.rsqrt(deg)
        # TODO(synk): original `normalize_adjacency` not in the provided source;
        # symmetric GCN normalization D^{-1/2} A D^{-1/2} assumed.
        An = A * dinv[:, :, None] * dinv[:, None, :]    # (bb, N, N)
        diag = (dinv * dinv).reshape(M, 1)              # = An[b, i, i]
        rowsum = jnp.sum(An, axis=-1).reshape(M, 1)

        locs_flat = locs.reshape(M, 2)
        x_flat = locs_flat[:, 0:1]
        y_flat = locs_flat[:, 1:2]
        s_flat = s.reshape(M, F)

        # --- neighbour aggregation machinery ------------------------------------------
        if use_flat:
            # Consolidate the bb tiny (N,N)@(N,F) matmuls into ONE (M,M)@(M,F) MXU push
            # per layer via a block-diagonal adjacency.
            if bb == 1:
                A_bd = An.reshape(N, N)
            else:
                A2 = An.reshape(M, N)
                rep = jnp.concatenate([A2] * bb, axis=1)                       # (M, M)
                rb = jax.lax.broadcasted_iota(jnp.int32, (M, M), 0) // N
                cb = jax.lax.broadcasted_iota(jnp.int32, (M, M), 1) // N
                A_bd = jnp.where(rb == cb, rep, 0.0)

            Axy = jnp.dot(cast(A_bd), cast(locs_flat),
                          preferred_element_type=jnp.float32)                  # (M, 2)

            def neighbour_sum(sf):
                # sum_{j != i} An[i,j] s_j == (An @ s)_i - An[i,i] s_i  (no (N,N) mask)
                return jnp.dot(cast(A_bd), cast(sf),
                               preferred_element_type=jnp.float32) - diag * sf
        else:
            Axy = jnp.einsum('bij,bjc->bic', cast(An), cast(locs),
                             preferred_element_type=jnp.float32).reshape(M, 2)

            def neighbour_sum(sf):
                sb = sf.reshape(bb, N, sf.shape[-1])
                r = jnp.einsum('bij,bjf->bif', cast(An), cast(sb),
                               preferred_element_type=jnp.float32)
                return r.reshape(M, sf.shape[-1]) - diag * sf

        # Edge (diff) aggregation, constant across layers; folded onto the A contraction:
        #   sum_j An[i,j]*(x_i - x_j) = x_i * rowsum_i - (An @ x)_i   (j=i term is zero)
        agg_x = x_flat * rowsum - Axy[:, 0:1]           # (M, 1)
        agg_y = y_flat * rowsum - Axy[:, 1:2]

        # --- graph layers: split weights, no lane-axis concatenation -------------------
        for l in range(n_layers):
            Ws = wrefs[3 * l][...]                      # (F_l, H_l)
            Wa = wrefs[3 * l + 1][...]                  # (F_l, H_l)
            Wdb = wrefs[3 * l + 2][...]                 # (8,  H_l): rows 0,1 = diff w, 2 = bias
            agg_s = neighbour_sum(s_flat)               # (M, F_l)
            h = (jnp.dot(cast(s_flat), cast(Ws), preferred_element_type=jnp.float32)
                 + jnp.dot(cast(agg_s), cast(Wa), preferred_element_type=jnp.float32)
                 + agg_x * Wdb[0:1, :]
                 + agg_y * Wdb[1:2, :]
                 + Wdb[2:3, :])
            s_flat = jnp.maximum(h, 0.0)                # (M, H_l)

        # --- packed policy/value head ---------------------------------------------------
        Wh = wrefs[-2][...]                             # (H, head_out)
        bh = wrefs[-1][...]                             # (1, head_out)
        out = jnp.dot(cast(s_flat), cast(Wh),
                      preferred_element_type=jnp.float32) + bh
        out_ref[...] = out.reshape(bb, N, head_out)

    return kernel


# ---------------------------------------------------------------------------
# Batch-block sizing against the per-chip VMEM budget
# ---------------------------------------------------------------------------
def _pick_batch_block(B, N, F, hidden_sizes, head_out, budget):
    hmax = max((F,) + tuple(hidden_sizes))
    wbytes = 0
    f = F
    for h in hidden_sizes:
        wbytes += (2 * f * h + 8 * h) * 4
        f = h
    wbytes += (f * head_out + head_out) * 4

    def est(bb):
        n = bb * N
        by = 2 * n * (2 + F) * 4            # double-buffered inputs
        by += 2 * n * head_out * 4          # double-buffered output
        by += 2 * wbytes                    # double-buffered weights
        by += 5 * bb * N * N * 4            # dx/dy/nsq/A/An class intermediates
        if bb > 1 and n <= _FLAT_AGG_MAX:
            by += n * n * 4                 # block-diagonal adjacency
        by += 4 * n * hmax * 4              # per-layer activations
        return by

    want_steps = 2 if B > 1 else 1          # >=2 steps: v7x megacore + DMA/compute overlap
    best = 1
    for cand in range(1, B + 1):
        if B % cand:
            continue
        if B // cand < want_steps:
            continue
        if est(cand) <= 0.75 * budget:
            best = cand
    return best


# ---------------------------------------------------------------------------
# Forward pass (StandardTrafficCoordinator.forward)
# ---------------------------------------------------------------------------
@functools.partial(jax.jit,
                   static_argnames=("thresh_sq", "bb", "head_out", "use_flat",
                                    "vmem_limit", "mxu_dtype"))
def _forward_impl(params, locs, states, *, thresh_sq, bb, head_out, use_flat,
                  vmem_limit, mxu_dtype):
    B, N, _ = locs.shape
    F = states.shape[-1]
    layers = params["graph_layers"]
    W4, b4, W5, b5 = params["heads"]
    H = W4.shape[0]

    # lane-packed policy/value head: cols 0:2 = fc4, col 2 = fc5
    Wh = jnp.zeros((H, head_out), jnp.float32).at[:, 0:2].set(W4).at[:, 2:3].set(W5)
    bh = jnp.zeros((1, head_out), jnp.float32).at[:, 0:2].set(b4).at[:, 2:3].set(b5)

    kernel = _make_kernel(len(layers), thresh_sq, head_out, use_flat, mxu_dtype)

    in_specs = [
        pl.BlockSpec((bb, N, 2), lambda i: (i, 0, 0)),            # locs
        pl.BlockSpec((bb, N, F), lambda i: (i, 0, 0)),            # states
    ]
    flat_w = []
    for (Ws, Wa, Wdb) in layers:
        for w in (Ws, Wa, Wdb):
            in_specs.append(pl.BlockSpec(w.shape, lambda i: (0, 0)))
            flat_w.append(w)
    for w in (Wh, bh):
        in_specs.append(pl.BlockSpec(w.shape, lambda i: (0, 0)))
        flat_w.append(w)

    out = pl.pallas_call(
        kernel,
        out_shape=jax.ShapeDtypeStruct((B, N, head_out), jnp.float32),
        grid=(B // bb,),
        in_specs=in_specs,
        out_specs=pl.BlockSpec((bb, N, head_out), lambda i: (i, 0, 0)),
        compiler_params=pltpu.CompilerParams(
            dimension_semantics=("parallel",),
            vmem_limit_bytes=int(vmem_limit)),
    )(locs, states, *flat_w)

    policies = out[..., 0:2]
    values = out[..., 2:3]
    return policies, values


def forward(params, locs, states, thresh_vec=(1.0, 1.0), batch_block=None,
            mxu_dtype=jnp.float32):
    B, N, _ = locs.shape
    F = states.shape[-1]
    hidden_sizes = tuple(int(ws.shape[1]) for (ws, _, _) in params["graph_layers"])

    threshold = float(np.linalg.norm(_normalize(np.asarray(thresh_vec, np.float32))))
    thresh_sq = threshold * threshold
    if thresh_sq <= 0.0:
        raise ValueError("thresh_vec must have a positive norm (self-loops are assumed).")

    head_out = _HEAD_WIDE if (B * N) <= _HEAD_GATE else _HEAD_NARROW
    budget = _vmem_budget_bytes()
    bb = batch_block if batch_block is not None else _pick_batch_block(
        B, N, F, hidden_sizes, head_out, budget)
    assert B % bb == 0, "batch_block must divide the batch size"
    use_flat = (bb * N) <= _FLAT_AGG_MAX

    return _forward_impl(params, locs, states,
                         thresh_sq=thresh_sq, bb=bb, head_out=head_out,
                         use_flat=use_flat, vmem_limit=budget, mxu_dtype=mxu_dtype)


# ---------------------------------------------------------------------------
# Parameter construction (deterministic, PyTorch-Linear-style uniform init)
# ---------------------------------------------------------------------------
def _linear_params(key, fan_in, fan_out):
    bound = float(1.0 / np.sqrt(fan_in))
    kw, kb = jax.random.split(key)
    W = jax.random.uniform(kw, (fan_in, fan_out), jnp.float32, -bound, bound)
    b = jax.random.uniform(kb, (1, fan_out), jnp.float32, -bound, bound)
    return W, b


def init_params(key, input_size, hidden_sizes=(32,)):
    params = {"graph_layers": []}
    f = input_size
    for h in hidden_sizes:
        key, sub = jax.random.split(key)
        W, b = _linear_params(sub, 2 * f + 2, h)        # Linear(2F+2 -> H), stored (in, out)
        Ws, Wa, Wd = W[:f], W[f:2 * f], W[2 * f:2 * f + 2]
        # pack the two diff-weight rows + bias into one sublane-aligned (8, H) array
        Wdb = jnp.zeros((8, h), jnp.float32).at[0:2].set(Wd).at[2:3].set(b)
        params["graph_layers"].append((Ws, Wa, Wdb))
        f = h
    key, k4 = jax.random.split(key)
    key, k5 = jax.random.split(key)
    W4, b4 = _linear_params(k4, f, 2)                   # fc4: H -> 2
    W5, b5 = _linear_params(k5, f, 1)                   # fc5: H -> 1
    params["heads"] = (W4, b4, W5, b5)
    return params


if __name__ == "__main__":
    key = jax.random.PRNGKey(0)
    input_size, hidden = 6, 32

    # Case 1: tiny shapes -> batch_block=1, 2-step grid, per-block flattened aggregation.
    batch, n_agents = 2, 4
    k_loc, k_state, k_param, key = jax.random.split(key, 4)
    locs = jax.random.uniform(k_loc, (batch, n_agents, 2), jnp.float32, 0.0, 3.0)
    states = jax.random.normal(k_state, (batch, n_agents, input_size), jnp.float32)
    params = init_params(k_param, input_size, hidden_sizes=(hidden,))
    policies, values = forward(params, locs, states)
    jax.block_until_ready((policies, values))
    assert policies.shape == (batch, n_agents, 2)
    assert values.shape == (batch, n_agents, 1)

    # Case 2: larger batch -> batch_block=2 exercises the block-diagonal consolidated
    # aggregation and the 2-step 'parallel' grid (feeds both TensorCores on v7x).
    batch2, n_agents2 = 4, 8
    k_loc2, k_state2, k_param2, key = jax.random.split(key, 4)
    locs2 = jax.random.uniform(k_loc2, (batch2, n_agents2, 2), jnp.float32, 0.0, 3.0)
    states2 = jax.random.normal(k_state2, (batch2, n_agents2, input_size), jnp.float32)
    params2 = init_params(k_param2, input_size, hidden_sizes=(hidden,))
    p2, v2 = forward(params2, locs2, states2)
    jax.block_until_ready((p2, v2))
    assert p2.shape == (batch2, n_agents2, 2)
    assert v2.shape == (batch2, n_agents2, 1)

    print("KERNEL_OK")
</pallas_src>

<mosaic_0001>
module attributes {stable_mosaic.version = 11 : i64} {
  func.func @kernel(%arg0: i32, %arg1: memref<1x4x2xf32, #tpu.memory_space<vmem>>, %arg2: memref<1x4x6xf32, #tpu.memory_space<vmem>>, %arg3: memref<6x32xf32, #tpu.memory_space<vmem>>, %arg4: memref<6x32xf32, #tpu.memory_space<vmem>>, %arg5: memref<8x32xf32, #tpu.memory_space<vmem>>, %arg6: memref<32x128xf32, #tpu.memory_space<vmem>>, %arg7: memref<1x128xf32, #tpu.memory_space<vmem>>, %arg8: memref<1x4x128xf32, #tpu.memory_space<vmem>>) attributes {dimension_semantics = [#tpu.dimension_semantics<parallel>], iteration_bounds = array<i64: 2>, scalar_prefetch = 0 : i64, scratch_operands = 0 : i64, tpu.core_type = #tpu.core_type<tc>, window_params = [{transform_indices = @transform_0, window_bounds = array<i64: 1, 4, 2>}, {transform_indices = @transform_1, window_bounds = array<i64: 1, 4, 6>}, {pipeline_mode = #tpu.pipeline_mode<synchronous>, transform_indices = @transform_2, window_bounds = array<i64: 6, 32>}, {pipeline_mode = #tpu.pipeline_mode<synchronous>, transform_indices = @transform_3, window_bounds = array<i64: 6, 32>}, {pipeline_mode = #tpu.pipeline_mode<synchronous>, transform_indices = @transform_4, window_bounds = array<i64: 8, 32>}, {pipeline_mode = #tpu.pipeline_mode<synchronous>, transform_indices = @transform_5, window_bounds = array<i64: 32, 128>}, {pipeline_mode = #tpu.pipeline_mode<synchronous>, transform_indices = @transform_6, window_bounds = array<i64: 1, 128>}, {transform_indices = @transform_7, window_bounds = array<i64: 1, 4, 128>}]} {
    %c0 = arith.constant 0 : index
    %c0_0 = arith.constant 0 : index
    %c0_1 = arith.constant 0 : index
    %0 = vector.load %arg1[%c0, %c0_0, %c0_1] : memref<1x4x2xf32, #tpu.memory_space<vmem>>, vector<1x4x2xf32>
    %c0_2 = arith.constant 0 : index
    %c0_3 = arith.constant 0 : index
    %c0_4 = arith.constant 0 : index
    %1 = vector.load %arg2[%c0_2, %c0_3, %c0_4] : memref<1x4x6xf32, #tpu.memory_space<vmem>>, vector<1x4x6xf32>
    %2 = vector.extract_strided_slice %0 {offsets = [0, 0, 0], sizes = [1, 4, 1], strides = [1, 1, 1]} : vector<1x4x2xf32> to vector<1x4x1xf32>
    %3 = vector.shape_cast %2 : vector<1x4x1xf32> to vector<1x4xf32>
    %4 = vector.extract_strided_slice %0 {offsets = [0, 0, 1], sizes = [1, 4, 1], strides = [1, 1, 1]} : vector<1x4x2xf32> to vector<1x4x1xf32>
    %5 = vector.shape_cast %4 : vector<1x4x1xf32> to vector<1x4xf32>
    %6 = vector.shape_cast %3 : vector<1x4xf32> to vector<1x4x1xf32>
    %7 = vector.shape_cast %3 : vector<1x4xf32> to vector<1x1x4xf32>
    %8 = vector.broadcast %6 : vector<1x4x1xf32> to vector<1x4x4xf32>
    %9 = vector.broadcast %7 : vector<1x1x4xf32> to vector<1x4x4xf32>
    %10 = arith.subf %8, %9 : vector<1x4x4xf32>
    %11 = vector.shape_cast %5 : vector<1x4xf32> to vector<1x4x1xf32>
    %12 = vector.shape_cast %5 : vector<1x4xf32> to vector<1x1x4xf32>
    %13 = vector.broadcast %11 : vector<1x4x1xf32> to vector<1x4x4xf32>
    %14 = vector.broadcast %12 : vector<1x1x4xf32> to vector<1x4x4xf32>
    %15 = arith.subf %13, %14 : vector<1x4x4xf32>
    %16 = arith.mulf %10, %10 : vector<1x4x4xf32>
    %17 = arith.mulf %15, %15 : vector<1x4x4xf32>
    %18 = arith.addf %16, %17 : vector<1x4x4xf32>
    %cst = arith.constant 1.99999988 : f32
    %19 = vector.broadcast %cst : f32 to vector<1x4x4xf32>
    %20 = arith.cmpf olt, %18, %19 : vector<1x4x4xf32>
    %21 = arith.extui %20 : vector<1x4x4xi1> to vector<1x4x4xi32>
    %22 = arith.sitofp %21 : vector<1x4x4xi32> to vector<1x4x4xf32>
    %cst_5 = arith.constant dense<0.000000e+00> : vector<1x4xf32>
    %23 = vector.multi_reduction <add>, %22, %cst_5 [2] : vector<1x4x4xf32> to vector<1x4xf32>
    %24 = math.rsqrt %23 : vector<1x4xf32>
    %25 = vector.shape_cast %24 : vector<1x4xf32> to vector<1x4x1xf32>
    %26 = vector.broadcast %25 : vector<1x4x1xf32> to vector<1x4x4xf32>
    %27 = arith.mulf %22, %26 : vector<1x4x4xf32>
    %28 = vector.shape_cast %24 : vector<1x4xf32> to vector<1x1x4xf32>
    %29 = vector.broadcast %28 : vector<1x1x4xf32> to vector<1x4x4xf32>
    %30 = arith.mulf %27, %29 : vector<1x4x4xf32>
    %31 = arith.mulf %24, %24 : vector<1x4xf32>
    %32 = vector.shape_cast %31 : vector<1x4xf32> to vector<4x1xf32>
    %cst_6 = arith.constant dense<0.000000e+00> : vector<1x4xf32>
    %33 = vector.multi_reduction <add>, %30, %cst_6 [2] : vector<1x4x4xf32> to vector<1x4xf32>
    %34 = vector.shape_cast %33 : vector<1x4xf32> to vector<4x1xf32>
    %35 = vector.shape_cast %0 : vector<1x4x2xf32> to vector<4x2xf32>
    %36 = vector.extract_strided_slice %35 {offsets = [0, 0], sizes = [4, 1], strides = [1, 1]} : vector<4x2xf32> to vector<4x1xf32>
    %37 = vector.extract_strided_slice %35 {offsets = [0, 1], sizes = [4, 1], strides = [1, 1]} : vector<4x2xf32> to vector<4x1xf32>
    %38 = vector.shape_cast %1 : vector<1x4x6xf32> to vector<4x6xf32>
    %39 = vector.shape_cast %30 : vector<1x4x4xf32> to vector<4x4xf32>
    %cst_7 = arith.constant dense<0.000000e+00> : vector<4x2xf32>
    %40 = tpu.matmul %39, %35, %cst_7 {dimension_numbers = #tpu.dot_dimension_numbers<[1], [0], [0], [1], [0, 0, 1, 1], [], []>} : vector<4x4xf32>, vector<4x2xf32>, vector<4x2xf32> -> vector<4x2xf32>
    %41 = arith.mulf %36, %34 : vector<4x1xf32>
    %42 = vector.extract_strided_slice %40 {offsets = [0, 0], sizes = [4, 1], strides = [1, 1]} : vector<4x2xf32> to vector<4x1xf32>
    %43 = arith.subf %41, %42 : vector<4x1xf32>
    %44 = arith.mulf %37, %34 : vector<4x1xf32>
    %45 = vector.extract_strided_slice %40 {offsets = [0, 1], sizes = [4, 1], strides = [1, 1]} : vector<4x2xf32> to vector<4x1xf32>
    %46 = arith.subf %44, %45 : vector<4x1xf32>
    %c0_8 = arith.constant 0 : index
    %c0_9 = arith.constant 0 : index
    %47 = vector.load %arg3[%c0_8, %c0_9] : memref<6x32xf32, #tpu.memory_space<vmem>>, vector<6x32xf32>
    %c0_10 = arith.constant 0 : index
    %c0_11 = arith.constant 0 : index
    %48 = vector.load %arg4[%c0_10, %c0_11] : memref<6x32xf32, #tpu.memory_space<vmem>>, vector<6x32xf32>
    %c0_12 = arith.constant 0 : index
    %c0_13 = arith.constant 0 : index
    %49 = vector.load %arg5[%c0_12, %c0_13] : memref<8x32xf32, #tpu.memory_space<vmem>>, vector<8x32xf32>
    %cst_14 = arith.constant dense<0.000000e+00> : vector<4x6xf32>
    %50 = tpu.matmul %39, %38, %cst_14 {dimension_numbers = #tpu.dot_dimension_numbers<[1], [0], [0], [1], [0, 0, 1, 1], [], []>} : vector<4x4xf32>, vector<4x6xf32>, vector<4x6xf32> -> vector<4x6xf32>
    %51 = vector.broadcast %32 : vector<4x1xf32> to vector<4x6xf32>
    %52 = arith.mulf %51, %38 : vector<4x6xf32>
    %53 = arith.subf %50, %52 : vector<4x6xf32>
    %cst_15 = arith.constant dense<0.000000e+00> : vector<4x32xf32>
    %54 = tpu.matmul %38, %47, %cst_15 {dimension_numbers = #tpu.dot_dimension_numbers<[1], [0], [0], [1], [0, 0, 1, 1], [], []>} : vector<4x6xf32>, vector<6x32xf32>, vector<4x32xf32> -> vector<4x32xf32>
    %cst_16 = arith.constant dense<0.000000e+00> : vector<4x32xf32>
    %55 = tpu.matmul %53, %48, %cst_16 {dimension_numbers = #tpu.dot_dimension_numbers<[1], [0], [0], [1], [0, 0, 1, 1], [], []>} : vector<4x6xf32>, vector<6x32xf32>, vector<4x32xf32> -> vector<4x32xf32>
    %56 = arith.addf %54, %55 : vector<4x32xf32>
    %57 = vector.extract_strided_slice %49 {offsets = [0, 0], sizes = [1, 32], strides = [1, 1]} : vector<8x32xf32> to vector<1x32xf32>
    %58 = vector.broadcast %43 : vector<4x1xf32> to vector<4x32xf32>
    %59 = vector.broadcast %57 : vector<1x32xf32> to vector<4x32xf32>
    %60 = arith.mulf %58, %59 : vector<4x32xf32>
    %61 = arith.addf %56, %60 : vector<4x32xf32>
    %62 = vector.extract_strided_slice %49 {offsets = [1, 0], sizes = [1, 32], strides = [1, 1]} : vector<8x32xf32> to vector<1x32xf32>
    %63 = vector.broadcast %46 : vector<4x1xf32> to vector<4x32xf32>
    %64 = vector.broadcast %62 : vector<1x32xf32> to vector<4x32xf32>
    %65 = arith.mulf %63, %64 : vector<4x32xf32>
    %66 = arith.addf %61, %65 : vector<4x32xf32>
    %67 = vector.extract_strided_slice %49 {offsets = [2, 0], sizes = [1, 32], strides = [1, 1]} : vector<8x32xf32> to vector<1x32xf32>
    %68 = vector.broadcast %67 : vector<1x32xf32> to vector<4x32xf32>
    %69 = arith.addf %66, %68 : vector<4x32xf32>
    %cst_17 = arith.constant 0.000000e+00 : f32
    %70 = vector.broadcast %cst_17 : f32 to vector<4x32xf32>
    %71 = arith.maximumf %69, %70 : vector<4x32xf32>
    %c0_18 = arith.constant 0 : index
    %c0_19 = arith.constant 0 : index
    %72 = vector.load %arg6[%c0_18, %c0_19] : memref<32x128xf32, #tpu.memory_space<vmem>>, vector<32x128xf32>
    %c0_20 = arith.constant 0 : index
    %c0_21 = arith.constant 0 : index
    %73 = vector.load %arg7[%c0_20, %c0_21] : memref<1x128xf32, #tpu.memory_space<vmem>>, vector<1x128xf32>
    %cst_22 = arith.constant dense<0.000000e+00> : vector<4x128xf32>
    %74 = tpu.matmul %71, %72, %cst_22 {dimension_numbers = #tpu.dot_dimension_numbers<[1], [0], [0], [1], [0, 0, 1, 1], [], []>} : vector<4x32xf32>, vector<32x128xf32>, vector<4x128xf32> -> vector<4x128xf32>
    %75 = vector.broadcast %73 : vector<1x128xf32> to vector<4x128xf32>
    %76 = arith.addf %74, %75 : vector<4x128xf32>
    %77 = vector.shape_cast %76 : vector<4x128xf32> to vector<1x4x128xf32>
    %c0_23 = arith.constant 0 : index
    %c0_24 = arith.constant 0 : index
    %c0_25 = arith.constant 0 : index
    %78 = vector.load %arg8[%c0_23, %c0_24, %c0_25] : memref<1x4x128xf32, #tpu.memory_space<vmem>>, vector<1x4x128xf32>
    tpu.vector_store %arg8[%c0_23, %c0_24, %c0_25], %77 {strides = array<i32>} : memref<1x4x128xf32, #tpu.memory_space<vmem>>, vector<1x4x128xf32>,
    return
  }
  func.func @transform_0(%arg0: i32) -> (i32, i32, i32) {
    %c0_i32 = arith.constant 0 : i32
    %c0_i32_0 = arith.constant 0 : i32
    %c0_i32_1 = arith.constant 0 : i32
    return %arg0, %c0_i32, %c0_i32_0 : i32, i32, i32
  }
  func.func @transform_1(%arg0: i32) -> (i32, i32, i32) {
    %c0_i32 = arith.constant 0 : i32
    %c0_i32_0 = arith.constant 0 : i32
    %c0_i32_1 = arith.constant 0 : i32
    return %arg0, %c0_i32, %c0_i32_0 : i32, i32, i32
  }
  func.func @transform_2(%arg0: i32) -> (i32, i32) {
    %c0_i32 = arith.constant 0 : i32
    %c0_i32_0 = arith.constant 0 : i32
    %c0_i32_1 = arith.constant 0 : i32
    return %c0_i32, %c0_i32_0 : i32, i32
  }
  func.func @transform_3(%arg0: i32) -> (i32, i32) {
    %c0_i32 = arith.constant 0 : i32
    %c0_i32_0 = arith.constant 0 : i32
    %c0_i32_1 = arith.constant 0 : i32
    return %c0_i32, %c0_i32_0 : i32, i32
  }
  func.func @transform_4(%arg0: i32) -> (i32, i32) {
    %c0_i32 = arith.constant 0 : i32
    %c0_i32_0 = arith.constant 0 : i32
    %c0_i32_1 = arith.constant 0 : i32
    return %c0_i32, %c0_i32_0 : i32, i32
  }
  func.func @transform_5(%arg0: i32) -> (i32, i32) {
    %c0_i32 = arith.constant 0 : i32
    %c0_i32_0 = arith.constant 0 : i32
    %c0_i32_1 = arith.constant 0 : i32
    return %c0_i32, %c0_i32_0 : i32, i32
  }
  func.func @transform_6(%arg0: i32) -> (i32, i32) {
    %c0_i32 = arith.constant 0 : i32
    %c0_i32_0 = arith.constant 0 : i32
    %c0_i32_1 = arith.constant 0 : i32
    return %c0_i32, %c0_i32_0 : i32, i32
  }
  func.func @transform_7(%arg0: i32) -> (i32, i32, i32) {
    %c0_i32 = arith.constant 0 : i32
    %c0_i32_0 = arith.constant 0 : i32
    %c0_i32_1 = arith.constant 0 : i32
    return %arg0, %c0_i32, %c0_i32_0 : i32, i32, i32
  }
}

</mosaic_0001>

<llo_original>
// kernel: _forward_impl.1
$region0: #{_forward_impl.1}
  #allocation0 [shape = 'u32[]', space=smem, size = 0x4, offset = 0x4, fixed_abs, tag = 'smem constant byte address 0x4 - core index']
  #allocation1 [shape = 'u32[144,128]{1,0:T(1,128)}', space=vmem, size = 0x12000, scoped, tag = 'internal scratch']
  %s0 = inlined_call_operand.vmem [shape: f32[2,4,2], index: 0, kind: input, shape index: {}]
  %s1 = inlined_call_operand.vmem [shape: f32[2,4,6], index: 1, kind: input, shape index: {}]
  %s2 = inlined_call_operand.vmem [shape: f32[6,32], index: 2, kind: input, shape index: {}]
  %s3 = inlined_call_operand.vmem [shape: f32[6,32], index: 3, kind: input, shape index: {}]
  %s4 = inlined_call_operand.vmem [shape: f32[8,32], index: 4, kind: input, shape index: {}]
  %s5 = inlined_call_operand.vmem [shape: f32[32,128], index: 5, kind: input, shape index: {}]
  %s6 = inlined_call_operand.vmem [shape: f32[1,128], index: 6, kind: input, shape index: {}]
  %s7 = inlined_call_operand.vmem [shape: f32[2,4,128], index: 7, kind: output, shape index: {}]
  %s8 = sld [smem:[#allocation0]]
  $region61: #{_forward_impl.1} parent=0
    _
  %s10 = ssub.s32 1, %s8
  %s11 = scalar_select 0, %s10, %s8
  loop: start=0, step=1, limit=4
  $region2: #{_forward_impl.1} parent=0 // loop_pre_header
    _
  $region3: #{_forward_impl.1} parent=0 // loop_header
    %s13 = sphi 0, %s17
    %p14 = scmp.ge.s32.totalorder %s13, 4
    %s23 = sphi 0, %s25
    %s26 = sphi 0, %s23
    %s27 = sphi 0, %s26
    %s43 = sphi 0, %s27
    %s49 = sphi 0, %s51
    %s52 = sphi 0, %s49
    %s53 = sphi 0, %s52
    %s69 = sphi 0, %s53
    %s73 = sphi 0, %s73
    %s75 = sphi 0, %s73
    %s76 = sphi 0, %s75
    %s90 = sphi 0, %s76
    %s94 = sphi 0, %s94
    %s96 = sphi 0, %s94
    %s97 = sphi 0, %s96
    %s111 = sphi 0, %s97
    %s115 = sphi 0, %s115
    %s117 = sphi 0, %s115
    %s118 = sphi 0, %s117
    %s132 = sphi 0, %s118
    %s136 = sphi 0, %s136
    %s138 = sphi 0, %s136
    %s139 = sphi 0, %s138
    %s153 = sphi 0, %s139
    %s157 = sphi 0, %s157
    %s159 = sphi 0, %s157
    %s160 = sphi 0, %s159
    %s174 = sphi 0, %s160
    %s180 = sphi 0, %s182
    %s183 = sphi 0, %s180
    %s184 = sphi 0, %s183
    %s200 = sphi 0, %s184
  $region4: #{_forward_impl.1} parent=0 // loop_header_branch
    %16 = sbr.rel (%p14) target = $region8
  $region5: #{_forward_impl.1} parent=0 // loop_body
    %s18 = ssub.s32 %s13, 1
    %s19 = ssub.s32 %s13, 2
    %s20 = sadd.s32 %s13, 1
    %s21 = ssub.s32 %s13, %s20
    %p22 = scmp.eq.s32.totalorder %s21, 0
    %s24 = sadd.s32 %s23, 1
    %s25 = scalar_select %p22, %s23, %s24
    %p28 = pneg %p22
    %p29 = scmp.eq.s32.totalorder %s13, 1
    %p30 = por %p28, %p29
    %p31 = scmp.ne.s32.totalorder %s23, %s26
    %p32 = scmp.eq.s32.totalorder %s13, 0
    %p33 = por %p31, %p32
    %p34 = scmp.ne.s32.totalorder %s23, %s26
    %p35 = scmp.eq.s32.totalorder %s18, 1
    %p36 = por %p34, %p35
    %p37 = scmp.ne.s32.totalorder %s26, %s27
    %p38 = scmp.eq.s32.totalorder %s18, 0
    %p39 = por %p37, %p38
    %p40 = scmp.ne.s32.totalorder %s26, %s27
    %p41 = scmp.eq.s32.totalorder %s19, 1
    %p42 = por %p40, %p41
    %p44 = scmp.ne.s32.totalorder %s27, %s43
    %p45 = scmp.eq.s32.totalorder %s19, 0
    %p46 = por %p44, %p45
    %s47 = ssub.s32 %s13, %s20
    %p48 = scmp.eq.s32.totalorder %s47, 0
    %s50 = sadd.s32 %s49, 1
    %s51 = scalar_select %p48, %s49, %s50
    %p54 = pneg %p48
    %p55 = scmp.eq.s32.totalorder %s13, 1
    %p56 = por %p54, %p55
    %p57 = scmp.ne.s32.totalorder %s49, %s52
    %p58 = scmp.eq.s32.totalorder %s13, 0
    %p59 = por %p57, %p58
    %p60 = scmp.ne.s32.totalorder %s49, %s52
    %p61 = scmp.eq.s32.totalorder %s18, 1
    %p62 = por %p60, %p61
    %p63 = scmp.ne.s32.totalorder %s52, %s53
    %p64 = scmp.eq.s32.totalorder %s18, 0
    %p65 = por %p63, %p64
    %p66 = scmp.ne.s32.totalorder %s52, %s53
    %p67 = scmp.eq.s32.totalorder %s19, 1
    %p68 = por %p66, %p67
    %p70 = scmp.ne.s32.totalorder %s53, %s69
    %p71 = scmp.eq.s32.totalorder %s19, 0
    %p72 = por %p70, %p71
    %s74 = sadd.s32 %s73, 1
    %p77 = scmp.eq.s32.totalorder %s13, 1
    %p78 = scmp.ne.s32.totalorder %s73, %s75
    %p79 = scmp.eq.s32.totalorder %s13, 0
    %p80 = por %p78, %p79
    %p81 = scmp.ne.s32.totalorder %s73, %s75
    %p82 = scmp.eq.s32.totalorder %s18, 1
    %p83 = por %p81, %p82
    %p84 = scmp.ne.s32.totalorder %s75, %s76
    %p85 = scmp.eq.s32.totalorder %s18, 0
    %p86 = por %p84, %p85
    %p87 = scmp.ne.s32.totalorder %s75, %s76
    %p88 = scmp.eq.s32.totalorder %s19, 1
    %p89 = por %p87, %p88
    %p91 = scmp.ne.s32.totalorder %s76, %s90
    %p92 = scmp.eq.s32.totalorder %s19, 0
    %p93 = por %p91, %p92
    %s95 = sadd.s32 %s94, 1
    %p98 = scmp.eq.s32.totalorder %s13, 1
    %p99 = scmp.ne.s32.totalorder %s94, %s96
    %p100 = scmp.eq.s32.totalorder %s13, 0
    %p101 = por %p99, %p100
    %p102 = scmp.ne.s32.totalorder %s94, %s96
    %p103 = scmp.eq.s32.totalorder %s18, 1
    %p104 = por %p102, %p103
    %p105 = scmp.ne.s32.totalorder %s96, %s97
    %p106 = scmp.eq.s32.totalorder %s18, 0
    %p107 = por %p105, %p106
    %p108 = scmp.ne.s32.totalorder %s96, %s97
    %p109 = scmp.eq.s32.totalorder %s19, 1
    %p110 = por %p108, %p109
    %p112 = scmp.ne.s32.totalorder %s97, %s111
    %p113 = scmp.eq.s32.totalorder %s19, 0
    %p114 = por %p112, %p113
    %s116 = sadd.s32 %s115, 1
    %p119 = scmp.eq.s32.totalorder %s13, 1
    %p120 = scmp.ne.s32.totalorder %s115, %s117
    %p121 = scmp.eq.s32.totalorder %s13, 0
    %p122 = por %p120, %p121
    %p123 = scmp.ne.s32.totalorder %s115, %s117
    %p124 = scmp.eq.s32.totalorder %s18, 1
    %p125 = por %p123, %p124
    %p126 = scmp.ne.s32.totalorder %s117, %s118
    %p127 = scmp.eq.s32.totalorder %s18, 0
    %p128 = por %p126, %p127
    %p129 = scmp.ne.s32.totalorder %s117, %s118
    %p130 = scmp.eq.s32.totalorder %s19, 1
    %p131 = por %p129, %p130
    %p133 = scmp.ne.s32.totalorder %s118, %s132
    %p134 = scmp.eq.s32.totalorder %s19, 0
    %p135 = por %p133, %p134
    %s137 = sadd.s32 %s136, 1
    %p140 = scmp.eq.s32.totalorder %s13, 1
    %p141 = scmp.ne.s32.totalorder %s136, %s138
    %p142 = scmp.eq.s32.totalorder %s13, 0
    %p143 = por %p141, %p142
    %p144 = scmp.ne.s32.totalorder %s136, %s138
    %p145 = scmp.eq.s32.totalorder %s18, 1
    %p146 = por %p144, %p145
    %p147 = scmp.ne.s32.totalorder %s138, %s139
    %p148 = scmp.eq.s32.totalorder %s18, 0
    %p149 = por %p147, %p148
    %p150 = scmp.ne.s32.totalorder %s138, %s139
    %p151 = scmp.eq.s32.totalorder %s19, 1
    %p152 = por %p150, %p151
    %p154 = scmp.ne.s32.totalorder %s139, %s153
    %p155 = scmp.eq.s32.totalorder %s19, 0
    %p156 = por %p154, %p155
    %s158 = sadd.s32 %s157, 1
    %p161 = scmp.eq.s32.totalorder %s13, 1
    %p162 = scmp.ne.s32.totalorder %s157, %s159
    %p163 = scmp.eq.s32.totalorder %s13, 0
    %p164 = por %p162, %p163
    %p165 = scmp.ne.s32.totalorder %s157, %s159
    %p166 = scmp.eq.s32.totalorder %s18, 1
    %p167 = por %p165, %p166
    %p168 = scmp.ne.s32.totalorder %s159, %s160
    %p169 = scmp.eq.s32.totalorder %s18, 0
    %p170 = por %p168, %p169
    %p171 = scmp.ne.s32.totalorder %s159, %s160
    %p172 = scmp.eq.s32.totalorder %s19, 1
    %p173 = por %p171, %p172
    %p175 = scmp.ne.s32.totalorder %s160, %s174
    %p176 = scmp.eq.s32.totalorder %s19, 0
    %p177 = por %p175, %p176
    %s178 = ssub.s32 %s13, %s20
    %p179 = scmp.eq.s32.totalorder %s178, 0
    %s181 = sadd.s32 %s180, 1
    %s182 = scalar_select %p179, %s180, %s181
    %p185 = pneg %p179
    %p186 = scmp.eq.s32.totalorder %s13, 1
    %p187 = por %p185, %p186
    %p188 = scmp.ne.s32.totalorder %s180, %s183
    %p189 = scmp.eq.s32.totalorder %s13, 0
    %p190 = por %p188, %p189
    %p191 = scmp.ne.s32.totalorder %s180, %s183
    %p192 = scmp.eq.s32.totalorder %s18, 1
    %p193 = por %p191, %p192
    %p194 = scmp.ne.s32.totalorder %s183, %s184
    %p195 = scmp.eq.s32.totalorder %s18, 0
    %p196 = por %p194, %p195
    %p197 = scmp.ne.s32.totalorder %s183, %s184
    %p198 = scmp.eq.s32.totalorder %s19, 1
    %p199 = por %p197, %p198
    %p201 = scmp.ne.s32.totalorder %s184, %s200
    %p202 = scmp.eq.s32.totalorder %s19, 0
    %p203 = por %p201, %p202
    %p204 = scmp.le.s32.totalorder 1, %s13
    %p205 = scmp.lt.s32.totalorder %s13, 3
    %p206 = pnand %p204, %p205
    %p207 = pneg %p206
    // Predicated region
    $region9: #{_forward_impl.1} parent=5 // pred_check
      _
    $region10: #{_forward_impl.1} parent=5 // pred_check_branch
      %209 = sbr.rel (%p206) target = $region12
    $region11: #{_forward_impl.1} parent=5 // pred_region
      %s210 = ssub.s32 %s13, 1
      // Predicated region
      $region13: #{_forward_impl.1} parent=11 // pred_check
        %p211 = pneg %p86
      $region14: #{_forward_impl.1} parent=11 // pred_check_branch
        %213 = sbr.rel (%p211) target = $region16
      $region15: #{_forward_impl.1} parent=11 // pred_region
        _
      $region16: #{_forward_impl.1} parent=11 // pred_fallthru
        _
      // Predicated region
      $region17: #{_forward_impl.1} parent=11 // pred_check
        %p214 = pneg %p107
      $region18: #{_forward_impl.1} parent=11 // pred_check_branch
        %216 = sbr.rel (%p214) target = $region20
      $region19: #{_forward_impl.1} parent=11 // pred_region
        _
      $region20: #{_forward_impl.1} parent=11 // pred_fallthru
        _
      // Predicated region
      $region21: #{_forward_impl.1} parent=11 // pred_check
        %p217 = pneg %p128
      $region22: #{_forward_impl.1} parent=11 // pred_check_branch
        %219 = sbr.rel (%p217) target = $region24
      $region23: #{_forward_impl.1} parent=11 // pred_region
        _
      $region24: #{_forward_impl.1} parent=11 // pred_fallthru
        _
      // Predicated region
      $region25: #{_forward_impl.1} parent=11 // pred_check
        %p220 = pneg %p149
      $region26: #{_forward_impl.1} parent=11 // pred_check_branch
        %222 = sbr.rel (%p220) target = $region28
      $region27: #{_forward_impl.1} parent=11 // pred_region
        _
      $region28: #{_forward_impl.1} parent=11 // pred_fallthru
        _
      // Predicated region
      $region29: #{_forward_impl.1} parent=11 // pred_check
        %p223 = pneg %p170
      $region30: #{_forward_impl.1} parent=11 // pred_check_branch
        %225 = sbr.rel (%p223) target = $region32
      $region31: #{_forward_impl.1} parent=11 // pred_region
        _
      $region32: #{_forward_impl.1} parent=11 // pred_fallthru
        _
    $region12: #{_forward_impl.1} parent=5 // pred_fallthru
      _
    %p226 = scmp.lt.s32.totalorder %s13, 2
    // Predicated region
    $region33: #{_forward_impl.1} parent=5 // pred_check
      %p227 = pneg %p226
    $region34: #{_forward_impl.1} parent=5 // pred_check_branch
      %229 = sbr.rel (%p227) target = $region36
    $region35: #{_forward_impl.1} parent=5 // pred_region
      // Predicated region
      $region37: #{_forward_impl.1} parent=35 // pred_check
        %p230 = pneg %p33
      $region38: #{_forward_impl.1} parent=35 // pred_check_branch
        %232 = sbr.rel (%p230) target = $region40
      $region39: #{_forward_impl.1} parent=35 // pred_region
        %p233 = scmp.lt.s32.totalorder %s13, 1
        %s234 = scalar_select %p233, %s13, 1
        %s235 = smul.addr %s234, 4
        %s236 = scalar_lea.vmem %s0, %s235
      $region40: #{_forward_impl.1} parent=35 // pred_fallthru
        _
      // Predicated region
      $region41: #{_forward_impl.1} parent=35 // pred_check
        %p237 = pneg %p59
      $region42: #{_forward_impl.1} parent=35 // pred_check_branch
        %239 = sbr.rel (%p237) target = $region44
      $region43: #{_forward_impl.1} parent=35 // pred_region
        %p240 = scmp.lt.s32.totalorder %s13, 1
        %s241 = scalar_select %p240, %s13, 1
        %s242 = smul.addr %s241, 4
        %s243 = scalar_lea.vmem %s1, %s242
      $region44: #{_forward_impl.1} parent=35 // pred_fallthru
        _
    $region36: #{_forward_impl.1} parent=5 // pred_fallthru
      _
    %p244 = scmp.le.s32.totalorder 1, %s13
    %p245 = scmp.lt.s32.totalorder %s13, 3
    %p246 = pnand %p244, %p245
    %p247 = pneg %p246
    // Predicated region
    $region45: #{_forward_impl.1} parent=5 // pred_check
      _
    $region46: #{_forward_impl.1} parent=5 // pred_check_branch
      %249 = sbr.rel (%p246) target = $region48
    $region47: #{_forward_impl.1} parent=5 // pred_region
      %s250 = ssub.s32 %s13, 1
      %p251 = scmp.lt.s32.totalorder %s18, 1
      %s252 = scalar_select %p251, %s18, 1
      %s253 = smul.addr %s252, 4
      %s254 = scalar_lea.vmem %s0, %s253
      %p255 = pneg %p39
      %p256 = pneg %p36
      %p257 = scmp.lt.s32.totalorder %s18, 1
      %s258 = scalar_select %p257, %s18, 1
      %s259 = smul.addr %s258, 4
      %s260 = scalar_lea.vmem %s1, %s259
      %p261 = pneg %p65
      %p262 = pneg %p62
      %p263 = pneg %p86
      %p264 = pneg %p83
      %p265 = pneg %p107
      %p266 = pneg %p104
      %p267 = pneg %p128
      %p268 = pneg %p125
      %p269 = pneg %p149
      %p270 = pneg %p146
      %p271 = pneg %p170
      %p272 = pneg %p167
      %p273 = pneg %p196
      %p274 = pneg %p193
      %p275 = scmp.lt.s32.totalorder %s18, 1
      %s276 = scalar_select %p275, %s18, 1
      %s277 = smul.addr %s276, 4
      %s278 = scalar_lea.vmem %s7, %s277
      %p279 = scmp.lt.s32.totalorder %s18, 1
      %s280 = scalar_select %p279, %s18, 1
      %s281 = smul.addr %s280, 4
      %s282 = scalar_lea.vmem %s0, %s281
      %p283 = scmp.lt.s32.totalorder %s18, 1
      %s284 = scalar_select %p283, %s18, 1
      %s285 = smul.addr %s284, 4
      %s286 = scalar_lea.vmem %s1, %s285
      %p287 = scmp.lt.s32.totalorder %s18, 1
      %s288 = scalar_select %p287, %s18, 1
      %s289 = smul.addr %s288, 4
      %s290 = scalar_lea.vmem %s7, %s289
      %v291 = vld [vmem:[%s282] sm:$0xf]
      %v292 = vld [vmem:[%s286] sm:$0xf]
      %294 = vset.pattern.permute.xlu0 0
      %295 = vperm.xlu0 %294, %v291
      %v296 = vpop.permute.xlu0 %295
      %v298 = vlaneseq
      %v299 = vand.u32 %v298, 127
      %v300 = vlaneseq
      %v301 = vshrl.u32 %v300, 7
      %v302 = vsub.s32 %v299, %v301
      %v303 = vrot.slane %v296, %v302
      %vm304 = vcmask 1042434
      %v305 = vsel %vm304, %v303, %v303
      %vm306 = vcmask 1043459
      %v307 = vsel %vm306, %v303, %v305
      %v309 = vsub.f32 %v296, %v307
      %310 = vset.pattern.permute.xlu0 1
      %311 = vperm.xlu0 %310, %v291
      %v312 = vpop.permute.xlu0 %311
      %v314 = vlaneseq
      %v315 = vshrl.u32 %v314, 7
      %v316 = vsub.s32 %v299, %v315
      %v317 = vrot.slane %v312, %v316
      %v318 = vsel %vm304, %v317, %v317
      %v319 = vsel %vm306, %v317, %v318
      %v321 = vsub.f32 %v312, %v319
      %v322 = vmul.f32 %v309, %v309
      %v323 = vmul.f32 %v321, %v321
      %v324 = vadd.f32 %v322, %v323
      %vm325 = vcmp.lt.f32.partialorder %v324, 1.9999999
      %v326 = vsel %vm325, 1, 0
      %v327 = vcvt.s32.f32 %v326
      %vm328 = vcmask 27648
      %v329 = vsel %vm328, %v327, 0.0
      %330 = vadd.xlane.f32.xlu0 %v329
      %v331 = vpop.xlane.xlu0 %330
      %v332 = vrsqrt.pop %v331
      %v333 = vmul.f32 %v327, %v332
      %v335 = vlaneseq
      %v336 = vshrl.u32 %v335, 7
      %v337 = vsub.s32 %v299, %v336
      %v338 = vrot.slane %v332, %v337
      %v339 = vsel %vm304, %v338, %v338
      %v340 = vsel %vm306, %v338, %v339
      %v342 = vmul.f32 %v333, %v340
      %v343 = vmul.f32 %v332, %v332
      %v344 = vsel %vm328, %v342, 0.0
      %345 = vadd.xlane.f32.xlu0 %v344
      %v346 = vpop.xlane.xlu0 %345
      %vm347 = vcmask 31744
      %v349 = vsel %vm347, %v342, 0
      %vm351 = vcmask 1043456
      %v352 = vsel %vm351, %v291, 0
      %354 = vmatprep.subr.mxu0 0.0
      %355 = vmatpush1.msra.mxu0 0.0
      %356 = vmatprep.subr.mxu0 0.0
      %357 = vmatpush1.msra.mxu0 0.0
      %358 = vmatprep.subr.mxu0 0.0
      %359 = vmatpush1.msra.mxu0 0.0
      %360 = vmatprep.subr.mxu0 0.0
      %361 = vmatpush1.msra.mxu0 0.0
      %362 = vmatprep.subr.mxu0 0.0
      %363 = vmatpush1.msra.mxu0 0.0
      %364 = vmatprep.subr.mxu0 0.0
      %365 = vmatpush1.msra.mxu0 0.0
      %366 = vmatprep.subr.mxu0 0.0
      %367 = vmatpush1.msra.mxu0 0.0
      %368 = vmatprep.subr.mxu0 0.0
      %369 = vmatpush1.msra.mxu0 0.0
      %370 = vmatprep.subr.mxu0 0.0
      %371 = vmatpush1.msra.mxu0 0.0
      %372 = vmatprep.subr.mxu0 0.0
      %373 = vmatpush1.msra.mxu0 0.0
      %374 = vmatprep.subr.mxu0 0.0
      %375 = vmatpush1.msra.mxu0 0.0
      %376 = vmatprep.subr.mxu0 0.0
      %377 = vmatpush1.msra.mxu0 0.0
      %378 = vmatprep.subr.mxu0 0.0
      %379 = vmatpush1.msra.mxu0 0.0
      %380 = vmatprep.subr.mxu0 0.0
      %381 = vmatpush1.msra.mxu0 0.0
      %382 = vmatprep.subr.mxu0 0.0
      %383 = vmatpush1.msra.mxu0 0.0
      %384 = vmatprep.subr.mxu0 0.0
      %385 = vmatpush1.msra.mxu0 %v352
      %386 = vmatprep.subr.mxu0 0.0
      %387 = vmatpush2.msra.mxu0 0.0
      %388 = vmatprep.subr.mxu0 0.0
      %389 = vmatpush2.msra.mxu0 0.0
      %390 = vmatprep.subr.mxu0 0.0
      %391 = vmatpush2.msra.mxu0 0.0
      %392 = vmatprep.subr.mxu0 0.0
      %393 = vmatpush2.msra.mxu0 0.0
      %394 = vmatprep.subr.mxu0 0.0
      %395 = vmatpush2.msra.mxu0 0.0
      %396 = vmatprep.subr.mxu0 0.0
      %397 = vmatpush2.msra.mxu0 0.0
      %398 = vmatprep.subr.mxu0 0.0
      %399 = vmatpush2.msra.mxu0 0.0
      %400 = vmatprep.subr.mxu0 0.0
      %401 = vmatpush2.msra.mxu0 0.0
      %402 = vmatprep.subr.mxu0 0.0
      %403 = vmatpush2.msra.mxu0 0.0
      %404 = vmatprep.subr.mxu0 0.0
      %405 = vmatpush2.msra.mxu0 0.0
      %406 = vmatprep.subr.mxu0 0.0
      %407 = vmatpush2.msra.mxu0 0.0
      %408 = vmatprep.subr.mxu0 0.0
      %409 = vmatpush2.msra.mxu0 0.0
      %410 = vmatprep.subr.mxu0 0.0
      %411 = vmatpush2.msra.mxu0 0.0
      %412 = vmatprep.subr.mxu0 0.0
      %413 = vmatpush2.msra.mxu0 0.0
      %414 = vmatprep.subr.mxu0 0.0
      %415 = vmatpush2.msra.mxu0 0.0
      %416 = vmatprep.subr.mxu0 0.0
      %417 = vmatpush2.msra.mxu0 0.0
      %418 = vmatprep.mubr.f32.mxu0 0.0
      %419 = vmatmul.mubr.f32.gmra.mxu0 %v349
      %v420 = vpop.f32.mrf.mxu0
      %v421 = vadd.f32 0.0, %v420
      %v422 = vpop.f32.mrf.mxu0
      %423 = vdwg.mxu0
      %v424 = vmul.f32 %v291, %v346
      %v425 = vsub.f32 %v424, %v421
      %v426 = vld [vmem:[%s2] sm:$0x3f]
      %v427 = vld [vmem:[%s3] sm:$0x3f]
      %v428 = vld [vmem:[%s4] sm:$0xff]
      %v430 = vsel %vm351, %v292, 0
      %432 = vmatprep.subr.mxu0 0.0
      %433 = vmatpush1.msra.mxu0 0.0
      %434 = vmatprep.subr.mxu0 0.0
      %435 = vmatpush1.msra.mxu0 0.0
      %436 = vmatprep.subr.mxu0 0.0
      %437 = vmatpush1.msra.mxu0 0.0
      %438 = vmatprep.subr.mxu0 0.0
      %439 = vmatpush1.msra.mxu0 0.0
      %440 = vmatprep.subr.mxu0 0.0
      %441 = vmatpush1.msra.mxu0 0.0
      %442 = vmatprep.subr.mxu0 0.0
      %443 = vmatpush1.msra.mxu0 0.0
      %444 = vmatprep.subr.mxu0 0.0
      %445 = vmatpush1.msra.mxu0 0.0
      %446 = vmatprep.subr.mxu0 0.0
      %447 = vmatpush1.msra.mxu0 0.0
      %448 = vmatprep.subr.mxu0 0.0
      %449 = vmatpush1.msra.mxu0 0.0
      %450 = vmatprep.subr.mxu0 0.0
      %451 = vmatpush1.msra.mxu0 0.0
      %452 = vmatprep.subr.mxu0 0.0
      %453 = vmatpush1.msra.mxu0 0.0
      %454 = vmatprep.subr.mxu0 0.0
      %455 = vmatpush1.msra.mxu0 0.0
      %456 = vmatprep.subr.mxu0 0.0
      %457 = vmatpush1.msra.mxu0 0.0
      %458 = vmatprep.subr.mxu0 0.0
      %459 = vmatpush1.msra.mxu0 0.0
      %460 = vmatprep.subr.mxu0 0.0
      %461 = vmatpush1.msra.mxu0 0.0
      %462 = vmatprep.subr.mxu0 0.0
      %463 = vmatpush1.msra.mxu0 %v430
      %464 = vmatprep.subr.mxu0 0.0
      %465 = vmatpush2.msra.mxu0 0.0
      %466 = vmatprep.subr.mxu0 0.0
      %467 = vmatpush2.msra.mxu0 0.0
      %468 = vmatprep.subr.mxu0 0.0
      %469 = vmatpush2.msra.mxu0 0.0
      %470 = vmatprep.subr.mxu0 0.0
      %471 = vmatpush2.msra.mxu0 0.0
      %472 = vmatprep.subr.mxu0 0.0
      %473 = vmatpush2.msra.mxu0 0.0
      %474 = vmatprep.subr.mxu0 0.0
      %475 = vmatpush2.msra.mxu0 0.0
      %476 = vmatprep.subr.mxu0 0.0
      %477 = vmatpush2.msra.mxu0 0.0
      %478 = vmatprep.subr.mxu0 0.0
      %479 = vmatpush2.msra.mxu0 0.0
      %480 = vmatprep.subr.mxu0 0.0
      %481 = vmatpush2.msra.mxu0 0.0
      %482 = vmatprep.subr.mxu0 0.0
      %483 = vmatpush2.msra.mxu0 0.0
      %484 = vmatprep.subr.mxu0 0.0
      %485 = vmatpush2.msra.mxu0 0.0
      %486 = vmatprep.subr.mxu0 0.0
      %487 = vmatpush2.msra.mxu0 0.0
      %488 = vmatprep.subr.mxu0 0.0
      %489 = vmatpush2.msra.mxu0 0.0
      %490 = vmatprep.subr.mxu0 0.0
      %491 = vmatpush2.msra.mxu0 0.0
      %492 = vmatprep.subr.mxu0 0.0
      %493 = vmatpush2.msra.mxu0 0.0
      %494 = vmatprep.subr.mxu0 0.0
      %495 = vmatpush2.msra.mxu0 0.0
      %496 = vmatprep.mubr.f32.mxu0 0.0
      %497 = vmatmul.mubr.f32.gmra.mxu0 %v349
      %v498 = vpop.f32.mrf.mxu0
      %v499 = vadd.f32 0.0, %v498
      %v500 = vpop.f32.mrf.mxu0
      %501 = vdwg.mxu0
      %v502 = vmul.f32 %v343, %v292
      %v503 = vsub.f32 %v499, %v502
      %vm504 = vcmask 48128
      %v506 = vsel %vm504, %v503, 0
      %vm508 = vcmask 1045504
      %v510 = vsel %vm508, %v427, 0
      %512 = vmatprep.subr.mxu0 0.0
      %513 = vmatpush1.msra.mxu0 0.0
      %514 = vmatprep.subr.mxu0 0.0
      %515 = vmatpush1.msra.mxu0 0.0
      %516 = vmatprep.subr.mxu0 0.0
      %517 = vmatpush1.msra.mxu0 0.0
      %518 = vmatprep.subr.mxu0 0.0
      %519 = vmatpush1.msra.mxu0 0.0
      %520 = vmatprep.subr.mxu0 0.0
      %521 = vmatpush1.msra.mxu0 0.0
      %522 = vmatprep.subr.mxu0 0.0
      %523 = vmatpush1.msra.mxu0 0.0
      %524 = vmatprep.subr.mxu0 0.0
      %525 = vmatpush1.msra.mxu0 0.0
      %526 = vmatprep.subr.mxu0 0.0
      %527 = vmatpush1.msra.mxu0 0.0
      %528 = vmatprep.subr.mxu0 0.0
      %529 = vmatpush1.msra.mxu0 0.0
      %530 = vmatprep.subr.mxu0 0.0
      %531 = vmatpush1.msra.mxu0 0.0
      %532 = vmatprep.subr.mxu0 0.0
      %533 = vmatpush1.msra.mxu0 0.0
      %534 = vmatprep.subr.mxu0 0.0
      %535 = vmatpush1.msra.mxu0 0.0
      %536 = vmatprep.subr.mxu0 0.0
      %537 = vmatpush1.msra.mxu0 0.0
      %538 = vmatprep.subr.mxu0 0.0
      %539 = vmatpush1.msra.mxu0 0.0
      %540 = vmatprep.subr.mxu0 0.0
      %541 = vmatpush1.msra.mxu0 0.0
      %542 = vmatprep.subr.mxu0 0.0
      %543 = vmatpush1.msra.mxu0 %v510
      %544 = vmatprep.subr.mxu0 0.0
      %545 = vmatpush2.msra.mxu0 0.0
      %546 = vmatprep.subr.mxu0 0.0
      %547 = vmatpush2.msra.mxu0 0.0
      %548 = vmatprep.subr.mxu0 0.0
      %549 = vmatpush2.msra.mxu0 0.0
      %550 = vmatprep.subr.mxu0 0.0
      %551 = vmatpush2.msra.mxu0 0.0
      %552 = vmatprep.subr.mxu0 0.0
      %553 = vmatpush2.msra.mxu0 0.0
      %554 = vmatprep.subr.mxu0 0.0
      %555 = vmatpush2.msra.mxu0 0.0
      %556 = vmatprep.subr.mxu0 0.0
      %557 = vmatpush2.msra.mxu0 0.0
      %558 = vmatprep.subr.mxu0 0.0
      %559 = vmatpush2.msra.mxu0 0.0
      %560 = vmatprep.subr.mxu0 0.0
      %561 = vmatpush2.msra.mxu0 0.0
      %562 = vmatprep.subr.mxu0 0.0
      %563 = vmatpush2.msra.mxu0 0.0
      %564 = vmatprep.subr.mxu0 0.0
      %565 = vmatpush2.msra.mxu0 0.0
      %566 = vmatprep.subr.mxu0 0.0
      %567 = vmatpush2.msra.mxu0 0.0
      %568 = vmatprep.subr.mxu0 0.0
      %569 = vmatpush2.msra.mxu0 0.0
      %570 = vmatprep.subr.mxu0 0.0
      %571 = vmatpush2.msra.mxu0 0.0
      %572 = vmatprep.subr.mxu0 0.0
      %573 = vmatpush2.msra.mxu0 0.0
      %574 = vmatprep.subr.mxu0 0.0
      %575 = vmatpush2.msra.mxu0 0.0
      %576 = vmatprep.mubr.f32.mxu0 0.0
      %577 = vmatmul.mubr.f32.gmra.mxu0 %v506
      %v578 = vpop.f32.mrf.mxu0
      %v579 = vadd.f32 0.0, %v578
      %v580 = vpop.f32.mrf.mxu0
      %581 = vdwg.mxu0
      %v582 = vsel %vm504, %v292, 0
      %v585 = vsel %vm508, %v426, 0
      %587 = vmatprep.subr.mxu0 0.0
      %588 = vmatpush1.msra.mxu0 0.0
      %589 = vmatprep.subr.mxu0 0.0
      %590 = vmatpush1.msra.mxu0 0.0
      %591 = vmatprep.subr.mxu0 0.0
      %592 = vmatpush1.msra.mxu0 0.0
      %593 = vmatprep.subr.mxu0 0.0
      %594 = vmatpush1.msra.mxu0 0.0
      %595 = vmatprep.subr.mxu0 0.0
      %596 = vmatpush1.msra.mxu0 0.0
      %597 = vmatprep.subr.mxu0 0.0
      %598 = vmatpush1.msra.mxu0 0.0
      %599 = vmatprep.subr.mxu0 0.0
      %600 = vmatpush1.msra.mxu0 0.0
      %601 = vmatprep.subr.mxu0 0.0
      %602 = vmatpush1.msra.mxu0 0.0
      %603 = vmatprep.subr.mxu0 0.0
      %604 = vmatpush1.msra.mxu0 0.0
      %605 = vmatprep.subr.mxu0 0.0
      %606 = vmatpush1.msra.mxu0 0.0
      %607 = vmatprep.subr.mxu0 0.0
      %608 = vmatpush1.msra.mxu0 0.0
      %609 = vmatprep.subr.mxu0 0.0
      %610 = vmatpush1.msra.mxu0 0.0
      %611 = vmatprep.subr.mxu0 0.0
      %612 = vmatpush1.msra.mxu0 0.0
      %613 = vmatprep.subr.mxu0 0.0
      %614 = vmatpush1.msra.mxu0 0.0
      %615 = vmatprep.subr.mxu0 0.0
      %616 = vmatpush1.msra.mxu0 0.0
      %617 = vmatprep.subr.mxu0 0.0
      %618 = vmatpush1.msra.mxu0 %v585
      %619 = vmatprep.subr.mxu0 0.0
      %620 = vmatpush2.msra.mxu0 0.0
      %621 = vmatprep.subr.mxu0 0.0
      %622 = vmatpush2.msra.mxu0 0.0
      %623 = vmatprep.subr.mxu0 0.0
      %624 = vmatpush2.msra.mxu0 0.0
      %625 = vmatprep.subr.mxu0 0.0
      %626 = vmatpush2.msra.mxu0 0.0
      %627 = vmatprep.subr.mxu0 0.0
      %628 = vmatpush2.msra.mxu0 0.0
      %629 = vmatprep.subr.mxu0 0.0
      %630 = vmatpush2.msra.mxu0 0.0
      %631 = vmatprep.subr.mxu0 0.0
      %632 = vmatpush2.msra.mxu0 0.0
      %633 = vmatprep.subr.mxu0 0.0
      %634 = vmatpush2.msra.mxu0 0.0
      %635 = vmatprep.subr.mxu0 0.0
      %636 = vmatpush2.msra.mxu0 0.0
      %637 = vmatprep.subr.mxu0 0.0
      %638 = vmatpush2.msra.mxu0 0.0
      %639 = vmatprep.subr.mxu0 0.0
      %640 = vmatpush2.msra.mxu0 0.0
      %641 = vmatprep.subr.mxu0 0.0
      %642 = vmatpush2.msra.mxu0 0.0
      %643 = vmatprep.subr.mxu0 0.0
      %644 = vmatpush2.msra.mxu0 0.0
      %645 = vmatprep.subr.mxu0 0.0
      %646 = vmatpush2.msra.mxu0 0.0
      %647 = vmatprep.subr.mxu0 0.0
      %648 = vmatpush2.msra.mxu0 0.0
      %649 = vmatprep.subr.mxu0 0.0
      %650 = vmatpush2.msra.mxu0 0.0
      %651 = vmatprep.mubr.f32.mxu0 0.0
      %652 = vmatmul.mubr.f32.gmra.mxu0 %v582
      %v653 = vpop.f32.mrf.mxu0
      %v654 = vadd.f32 %v579, %v653
      %v655 = vpop.f32.mrf.mxu0
      %656 = vdwg.mxu0
      %658 = vset.pattern.permute.xlu0 0
      %659 = vperm.xlu0 %658, %v425
      %v660 = vpop.permute.xlu0 %659
      %v662 = vlaneseq
      %v663 = vshrl.u32 %v662, 7
      %v664 = vsub.s32 0, %v663
      %v665 = vrot.slane %v428, %v664
      %v666 = vmul.f32 %v660, %v665
      %v667 = vadd.f32 %v654, %v666
      %668 = vset.pattern.permute.xlu0 1
      %669 = vperm.xlu0 %668, %v425
      %v670 = vpop.permute.xlu0 %669
      %v672 = vlaneseq
      %v673 = vshrl.u32 %v672, 7
      %v674 = vsub.s32 1, %v673
      %v675 = vrot.slane %v428, %v674
      %v676 = vmul.f32 %v670, %v675
      %v677 = vadd.f32 %v667, %v676
      %v678 = vlaneseq
      %v679 = vshrl.u32 %v678, 7
      %v680 = vsub.s32 2, %v679
      %v681 = vrot.slane %v428, %v680
      %v682 = vadd.f32 %v677, %v681
      %v683 = vmax.f32 %v682, 0.0
      %v684 = vld [vmem:[%s5] sm:$0xff]
      %v685 = vld [vmem:[%s5 + $0x8] sm:$0xff]
      %v686 = vld [vmem:[%s5 + $0x10] sm:$0xff]
      %v687 = vld [vmem:[%s5 + $0x18] sm:$0xff]
      %v688 = vld [vmem:[%s6] sm:$0x1]
      %v690 = vlaneseq
      %v691 = vshrl.u32 %v690, 7
      %v692 = vsub.s32 0, %v691
      %v693 = vrot.slane %v688, %v692
      %vm695 = vcmask 261120
      %v697 = vsel %vm695, %v683, 0
      %699 = vmatprep.subr.mxu0 0.0
      %700 = vmatpush1.msra.mxu0 0.0
      %701 = vmatprep.subr.mxu0 0.0
      %702 = vmatpush1.msra.mxu0 0.0
      %703 = vmatprep.subr.mxu0 0.0
      %704 = vmatpush1.msra.mxu0 0.0
      %705 = vmatprep.subr.mxu0 0.0
      %706 = vmatpush1.msra.mxu0 0.0
      %707 = vmatprep.subr.mxu0 0.0
      %708 = vmatpush1.msra.mxu0 0.0
      %709 = vmatprep.subr.mxu0 0.0
      %710 = vmatpush1.msra.mxu0 0.0
      %711 = vmatprep.subr.mxu0 0.0
      %712 = vmatpush1.msra.mxu0 0.0
      %713 = vmatprep.subr.mxu0 0.0
      %714 = vmatpush1.msra.mxu0 0.0
      %715 = vmatprep.subr.mxu0 0.0
      %716 = vmatpush1.msra.mxu0 0.0
      %717 = vmatprep.subr.mxu0 0.0
      %718 = vmatpush1.msra.mxu0 0.0
      %719 = vmatprep.subr.mxu0 0.0
      %720 = vmatpush1.msra.mxu0 0.0
      %721 = vmatprep.subr.mxu0 0.0
      %722 = vmatpush1.msra.mxu0 0.0
      %723 = vmatprep.subr.mxu0 0.0
      %724 = vmatpush1.msra.mxu0 %v687
      %725 = vmatprep.subr.mxu0 0.0
      %726 = vmatpush1.msra.mxu0 %v686
      %727 = vmatprep.subr.mxu0 0.0
      %728 = vmatpush1.msra.mxu0 %v685
      %729 = vmatprep.subr.mxu0 0.0
      %730 = vmatpush1.msra.mxu0 %v684
      %731 = vmatprep.subr.mxu0 0.0
      %732 = vmatpush2.msra.mxu0 0.0
      %733 = vmatprep.subr.mxu0 0.0
      %734 = vmatpush2.msra.mxu0 0.0
      %735 = vmatprep.subr.mxu0 0.0
      %736 = vmatpush2.msra.mxu0 0.0
      %737 = vmatprep.subr.mxu0 0.0
      %738 = vmatpush2.msra.mxu0 0.0
      %739 = vmatprep.subr.mxu0 0.0
      %740 = vmatpush2.msra.mxu0 0.0
      %741 = vmatprep.subr.mxu0 0.0
      %742 = vmatpush2.msra.mxu0 0.0
      %743 = vmatprep.subr.mxu0 0.0
      %744 = vmatpush2.msra.mxu0 0.0
      %745 = vmatprep.subr.mxu0 0.0
      %746 = vmatpush2.msra.mxu0 0.0
      %747 = vmatprep.subr.mxu0 0.0
      %748 = vmatpush2.msra.mxu0 0.0
      %749 = vmatprep.subr.mxu0 0.0
      %750 = vmatpush2.msra.mxu0 0.0
      %751 = vmatprep.subr.mxu0 0.0
      %752 = vmatpush2.msra.mxu0 0.0
      %753 = vmatprep.subr.mxu0 0.0
      %754 = vmatpush2.msra.mxu0 0.0
      %755 = vmatprep.subr.mxu0 0.0
      %756 = vmatpush2.msra.mxu0 0.0
      %757 = vmatprep.subr.mxu0 0.0
      %758 = vmatpush2.msra.mxu0 0.0
      %759 = vmatprep.subr.mxu0 0.0
      %760 = vmatpush2.msra.mxu0 0.0
      %761 = vmatprep.subr.mxu0 0.0
      %762 = vmatpush2.msra.mxu0 0.0
      %763 = vmatprep.mubr.f32.mxu0 0.0
      %764 = vmatmul.mubr.f32.gmra.mxu0 %v697
      %v765 = vpop.f32.mrf.mxu0
      %v766 = vadd.f32 %v693, %v765
      %v767 = vpop.f32.mrf.mxu0
      %768 = vdwg.mxu0
      %769 = vst [vmem:[%s290] sm:$0xf] %v766
      %p770 = scmp.lt.s32.totalorder %s18, 1
      %s771 = scalar_select %p770, %s18, 1
      %s772 = smul.addr %s771, 4
      %s773 = scalar_lea.vmem %s7, %s772
      // Predicated region
      $region49: #{_forward_impl.1} parent=47 // pred_check
        %p774 = pneg %p193
      $region50: #{_forward_impl.1} parent=47 // pred_check_branch
        %776 = sbr.rel (%p774) target = $region52
      $region51: #{_forward_impl.1} parent=47 // pred_region
        _
      $region52: #{_forward_impl.1} parent=47 // pred_fallthru
        _
    $region48: #{_forward_impl.1} parent=5 // pred_fallthru
      _
    %p777 = scmp.le.s32.totalorder 2, %s13
    // Predicated region
    $region53: #{_forward_impl.1} parent=5 // pred_check
      %p778 = pneg %p777
    $region54: #{_forward_impl.1} parent=5 // pred_check_branch
      %780 = sbr.rel (%p778) target = $region56
    $region55: #{_forward_impl.1} parent=5 // pred_region
      %s781 = ssub.s32 %s13, 2
      // Predicated region
      $region57: #{_forward_impl.1} parent=55 // pred_check
        %p782 = pneg %p199
      $region58: #{_forward_impl.1} parent=55 // pred_check_branch
        %784 = sbr.rel (%p782) target = $region60
      $region59: #{_forward_impl.1} parent=55 // pred_region
        %p785 = scmp.lt.s32.totalorder %s19, 1
        %s786 = scalar_select %p785, %s19, 1
        %s787 = smul.addr %s786, 4
        %s788 = scalar_lea.vmem %s7, %s787
      $region60: #{_forward_impl.1} parent=55 // pred_fallthru
        _
    $region56: #{_forward_impl.1} parent=5 // pred_fallthru
      _
  $region6: #{_forward_impl.1} parent=0 // loop_footer
    %s17 = sadd.s32 1, %s13
  $region7: #{_forward_impl.1} parent=0 // loop_footer_branch
    %12 = sbr.rel target = $region3
  $region8: #{_forward_impl.1} parent=0 // loop_exit
    _

</llo_original>
